<compile_context>
chip_gen: v7x
topology: tpu7x:2x2x1
jax: 0.10.0
libtpu: 0.0.40
codegen_flags: <defaults>
</compile_context>

<pallas_src>
import functools

import jax
import jax.numpy as jnp
from jax.experimental import pallas as pl
from jax.experimental.pallas import tpu as pltpu


# Padded (lane-dense) internal sizes.
H1_PAD = 512     # 400 -> 512
H2_PAD = 384     # 300 -> 384
HEAD_PAD = 128   # mu (A lanes) + value (1 lane) + zero padding -> 128 lanes


# ----------------------------- Pallas kernel --------------------------------


def _actor_critic_kernel(
    action_dim,   # static (closed over)
    x_ref,        # [B, state_dim]
    w1_ref,       # [state_dim, H1_PAD]
    b1_ref,       # [1, H1_PAD]
    w2_ref,       # [H1_PAD, H2_PAD]
    b2_ref,       # [1, H2_PAD]
    wh_ref,       # [H2_PAD, HEAD_PAD]   (fused mu | value | zero-pad)
    bh_ref,       # [1, HEAD_PAD]
    out_ref,      # out: [B, HEAD_PAD]   (lanes [0:A]=tanh(mu), lane A=value)
):
    x = x_ref[...]

    # Shared trunk: Linear -> ReLU -> Linear -> ReLU (MXU matmuls + VPU relu).
    h1 = jnp.dot(x, w1_ref[...], preferred_element_type=jnp.float32) + b1_ref[...]
    h1 = jnp.maximum(h1, 0.0)
    h2 = jnp.dot(h1, w2_ref[...], preferred_element_type=jnp.float32) + b2_ref[...]
    h2 = jnp.maximum(h2, 0.0)

    # Fused heads: one lane-dense MXU pass produces mu and value together.
    heads = jnp.dot(h2, wh_ref[...], preferred_element_type=jnp.float32) + bh_ref[...]

    # tanh only on the mu lanes; value lane (and zero padding) passes through.
    lane = jax.lax.broadcasted_iota(jnp.int32, heads.shape, dimension=1)
    out_ref[...] = jnp.where(lane < action_dim, jnp.tanh(heads), heads)


# ------------------------------ wrapper --------------------------------------


@functools.partial(jax.jit, static_argnames=("action_dim",))
def actor_critic_forward(state, kparams, log_std, action_dim):
    """Pallas-fused forward pass.

    Args:
      state: [B, state_dim] float32 (1-D state is promoted to [1, state_dim],
        mirroring the PyTorch unsqueeze(0)).
      kparams: packed/padded kernel parameters (see pack_params).
      log_std: [1, action_dim] float32 parameter.
      action_dim: int (static).

    Returns:
      (mu, std, value): [B, A], [B, A], [B, 1] float32 — the Normal(mu, std)
      distribution parameters and the value estimate.
    """
    if state.ndim == 1:
        state = state[None, :]
    B, S = state.shape

    vmem_spec = pl.BlockSpec(memory_space=pltpu.MemorySpace.VMEM)

    flops = 2 * B * (S * H1_PAD + H1_PAD * H2_PAD + H2_PAD * HEAD_PAD)
    bytes_accessed = 4 * (
        B * S
        + S * H1_PAD + H1_PAD
        + H1_PAD * H2_PAD + H2_PAD
        + H2_PAD * HEAD_PAD + HEAD_PAD
        + B * HEAD_PAD
    )

    # NOTE: for large rollout batches (B >= 128), switch to a 1-D grid over
    # batch blocks with dimension_semantics=("parallel",) so v7x's two
    # TensorCores both participate and per-block activations stay small.
    out = pl.pallas_call(
        functools.partial(_actor_critic_kernel, action_dim),
        out_shape=jax.ShapeDtypeStruct((B, HEAD_PAD), jnp.float32),
        in_specs=[vmem_spec] * 7,
        out_specs=vmem_spec,
        cost_estimate=pl.CostEstimate(
            flops=flops,
            transcendentals=B * HEAD_PAD,
            bytes_accessed=bytes_accessed,
        ),
    )(
        state,
        kparams["w1"], kparams["b1"],
        kparams["w2"], kparams["b2"],
        kparams["w_heads"], kparams["b_heads"],
    )

    mu = out[:, :action_dim]
    value = out[:, action_dim:action_dim + 1]
    # std depends only on a parameter (not on state): compute outside the
    # kernel and broadcast lazily — removes one output buffer / DMA per call.
    std = jnp.broadcast_to(jnp.exp(log_std), mu.shape)
    return mu, std, value


# --------------------------- parameter creation ------------------------------


def init_params(key, state_dim, action_dim, hidden1=400, hidden2=300):
    """Deterministic synthetic parameter init (matches nn.Linear shapes,
    stored transposed as [in, out])."""
    ks = jax.random.split(key, 8)

    def lin(kw, kb, fan_in, fan_out):
        bound = 1.0 / jnp.sqrt(fan_in)
        w = jax.random.uniform(kw, (fan_in, fan_out), jnp.float32, -bound, bound)
        b = jax.random.uniform(kb, (1, fan_out), jnp.float32, -bound, bound)
        return w, b

    w1, b1 = lin(ks[0], ks[1], state_dim, hidden1)
    w2, b2 = lin(ks[2], ks[3], hidden1, hidden2)
    w_mu, b_mu = lin(ks[4], ks[5], hidden2, action_dim)
    w_v, b_v = lin(ks[6], ks[7], hidden2, 1)
    log_std = jnp.zeros((1, action_dim), jnp.float32)  # nn.Parameter(zeros)

    return dict(
        w1=w1, b1=b1, w2=w2, b2=b2,
        w_mu=w_mu, b_mu=b_mu, log_std=log_std,
        w_v=w_v, b_v=b_v,
    )


def pack_params(p, state_dim, action_dim):
    """Zero-pad hidden dims to (512, 384) and fuse mu/value heads into one
    lane-dense [H2_PAD, 128] matrix.  Zero padding is exact: padded hidden
    units are ReLU(0) = 0 and padded weight rows/cols are 0, so they
    contribute nothing.  (Optionally cast weights to bf16 here for a further
    DMA/MXU win on v6e/v7x.)"""
    h1 = p["w1"].shape[1]
    h2 = p["w2"].shape[1]

    w1 = jnp.zeros((state_dim, H1_PAD), jnp.float32).at[:, :h1].set(p["w1"])
    b1 = jnp.zeros((1, H1_PAD), jnp.float32).at[:, :h1].set(p["b1"])

    w2 = jnp.zeros((H1_PAD, H2_PAD), jnp.float32).at[:h1, :h2].set(p["w2"])
    b2 = jnp.zeros((1, H2_PAD), jnp.float32).at[:, :h2].set(p["b2"])

    wh = jnp.zeros((H2_PAD, HEAD_PAD), jnp.float32)
    wh = wh.at[:h2, :action_dim].set(p["w_mu"])
    wh = wh.at[:h2, action_dim:action_dim + 1].set(p["w_v"])
    bh = jnp.zeros((1, HEAD_PAD), jnp.float32)
    bh = bh.at[:, :action_dim].set(p["b_mu"])
    bh = bh.at[:, action_dim:action_dim + 1].set(p["b_v"])

    return dict(w1=w1, b1=b1, w2=w2, b2=b2, w_heads=wh, b_heads=bh)


def _reference_forward(state, p):
    """Pure-JAX reference (mirrors the PyTorch module, unpadded weights)."""
    h1 = jnp.maximum(state @ p["w1"] + p["b1"], 0.0)
    h2 = jnp.maximum(h1 @ p["w2"] + p["b2"], 0.0)
    mu = jnp.tanh(h2 @ p["w_mu"] + p["b_mu"])
    std = jnp.broadcast_to(jnp.exp(p["log_std"]), mu.shape)
    value = h2 @ p["w_v"] + p["b_v"]
    return mu, std, value


# ---------------------------------- main -------------------------------------

if __name__ == "__main__":
    key = jax.random.PRNGKey(0)
    k_param, k_state = jax.random.split(key)

    batch = 8
    state_dim = 16
    action_dim = 4

    params = init_params(k_param, state_dim, action_dim)
    kernel_params = pack_params(params, state_dim, action_dim)

    state = jax.random.normal(k_state, (batch, state_dim), jnp.float32)
    # PyTorch semantics: a 1-D state would be unsqueezed to [1, state_dim]
    if state.ndim == 1:
        state = state[None, :]

    mu, std, value = actor_critic_forward(
        state, kernel_params, params["log_std"], action_dim
    )
    jax.block_until_ready((mu, std, value))

    # correctness check against the pure-JAX reference of the torch module
    mu_ref, std_ref, value_ref = _reference_forward(state, params)
    assert mu.shape == (batch, action_dim)
    assert std.shape == (batch, action_dim)
    assert value.shape == (batch, 1)
    assert jnp.allclose(mu, mu_ref, atol=1e-5, rtol=1e-5)
    assert jnp.allclose(std, std_ref, atol=1e-5, rtol=1e-5)
    assert jnp.allclose(value, value_ref, atol=1e-5, rtol=1e-5)

    # TODO(synk): torch.distributions.Normal object itself has no Pallas
    # equivalent; (mu, std) fully parameterize it for the caller.
    print("KERNEL_OK")
</pallas_src>

<mosaic_0001>
module attributes {stable_mosaic.version = 11 : i64} {
  func.func @_actor_critic_kernel(%arg0: memref<8x16xf32, #tpu.memory_space<vmem>>, %arg1: memref<16x512xf32, #tpu.memory_space<vmem>>, %arg2: memref<1x512xf32, #tpu.memory_space<vmem>>, %arg3: memref<512x384xf32, #tpu.memory_space<vmem>>, %arg4: memref<1x384xf32, #tpu.memory_space<vmem>>, %arg5: memref<384x128xf32, #tpu.memory_space<vmem>>, %arg6: memref<1x128xf32, #tpu.memory_space<vmem>>, %arg7: memref<8x128xf32, #tpu.memory_space<vmem>>) attributes {dimension_semantics = [], scalar_prefetch = 0 : i64, scratch_operands = 0 : i64, tpu.core_type = #tpu.core_type<tc>} {
    %c0 = arith.constant 0 : index
    %c0_0 = arith.constant 0 : index
    %0 = vector.load %arg0[%c0, %c0_0] : memref<8x16xf32, #tpu.memory_space<vmem>>, vector<8x16xf32>
    %c0_1 = arith.constant 0 : index
    %c0_2 = arith.constant 0 : index
    %1 = vector.load %arg1[%c0_1, %c0_2] : memref<16x512xf32, #tpu.memory_space<vmem>>, vector<16x512xf32>
    %cst = arith.constant dense<0.000000e+00> : vector<8x512xf32>
    %2 = tpu.matmul %0, %1, %cst {dimension_numbers = #tpu.dot_dimension_numbers<[1], [0], [0], [1], [0, 0, 1, 1], [], []>} : vector<8x16xf32>, vector<16x512xf32>, vector<8x512xf32> -> vector<8x512xf32>
    %c0_3 = arith.constant 0 : index
    %c0_4 = arith.constant 0 : index
    %3 = vector.load %arg2[%c0_3, %c0_4] : memref<1x512xf32, #tpu.memory_space<vmem>>, vector<1x512xf32>
    %4 = vector.broadcast %3 : vector<1x512xf32> to vector<8x512xf32>
    %5 = arith.addf %2, %4 : vector<8x512xf32>
    %cst_5 = arith.constant 0.000000e+00 : f32
    %6 = vector.broadcast %cst_5 : f32 to vector<8x512xf32>
    %7 = arith.maximumf %5, %6 : vector<8x512xf32>
    %c0_6 = arith.constant 0 : index
    %c0_7 = arith.constant 0 : index
    %8 = vector.load %arg3[%c0_6, %c0_7] : memref<512x384xf32, #tpu.memory_space<vmem>>, vector<512x384xf32>
    %cst_8 = arith.constant dense<0.000000e+00> : vector<8x384xf32>
    %9 = tpu.matmul %7, %8, %cst_8 {dimension_numbers = #tpu.dot_dimension_numbers<[1], [0], [0], [1], [0, 0, 1, 1], [], []>} : vector<8x512xf32>, vector<512x384xf32>, vector<8x384xf32> -> vector<8x384xf32>
    %c0_9 = arith.constant 0 : index
    %c0_10 = arith.constant 0 : index
    %10 = vector.load %arg4[%c0_9, %c0_10] : memref<1x384xf32, #tpu.memory_space<vmem>>, vector<1x384xf32>
    %11 = vector.broadcast %10 : vector<1x384xf32> to vector<8x384xf32>
    %12 = arith.addf %9, %11 : vector<8x384xf32>
    %cst_11 = arith.constant 0.000000e+00 : f32
    %13 = vector.broadcast %cst_11 : f32 to vector<8x384xf32>
    %14 = arith.maximumf %12, %13 : vector<8x384xf32>
    %c0_12 = arith.constant 0 : index
    %c0_13 = arith.constant 0 : index
    %15 = vector.load %arg5[%c0_12, %c0_13] : memref<384x128xf32, #tpu.memory_space<vmem>>, vector<384x128xf32>
    %cst_14 = arith.constant dense<0.000000e+00> : vector<8x128xf32>
    %16 = tpu.matmul %14, %15, %cst_14 {dimension_numbers = #tpu.dot_dimension_numbers<[1], [0], [0], [1], [0, 0, 1, 1], [], []>} : vector<8x384xf32>, vector<384x128xf32>, vector<8x128xf32> -> vector<8x128xf32>
    %c0_15 = arith.constant 0 : index
    %c0_16 = arith.constant 0 : index
    %17 = vector.load %arg6[%c0_15, %c0_16] : memref<1x128xf32, #tpu.memory_space<vmem>>, vector<1x128xf32>
    %18 = vector.broadcast %17 : vector<1x128xf32> to vector<8x128xf32>
    %19 = arith.addf %16, %18 : vector<8x128xf32>
    %20 = tpu.iota {dimensions = array<i32: 1>} : vector<8x128xi32>
    %c4_i32 = arith.constant 4 : i32
    %21 = vector.broadcast %c4_i32 : i32 to vector<8x128xi32>
    %22 = arith.cmpi slt, %20, %21 : vector<8x128xi32>
    %23 = math.tanh %19 : vector<8x128xf32>
    %24 = arith.select %22, %23, %19 : vector<8x128xi1>, vector<8x128xf32>
    %c0_17 = arith.constant 0 : index
    %c0_18 = arith.constant 0 : index
    %25 = vector.load %arg7[%c0_17, %c0_18] : memref<8x128xf32, #tpu.memory_space<vmem>>, vector<8x128xf32>
    tpu.vector_store %arg7[%c0_17, %c0_18], %24 {strides = array<i32>} : memref<8x128xf32, #tpu.memory_space<vmem>>, vector<8x128xf32>,
    return
  }
}

</mosaic_0001>

<llo_original>
// kernel: actor_critic_forward.1
$region0: #{actor_critic_forward.1}
  #allocation0 [shape = 'u32[]', space=smem, size = 0x4, offset = 0x4, fixed_abs, tag = 'smem constant byte address 0x4 - core index']
  #allocation1 [shape = 'u32[144,128]{1,0:T(1,128)}', space=vmem, size = 0x12000, scoped, tag = 'internal scratch']
  %s0 = inlined_call_operand.hbm [shape: f32[8,16], index: 0, kind: input, shape index: {}]
  %s1 = inlined_call_operand.hbm [shape: f32[16,512], index: 1, kind: input, shape index: {}]
  %s2 = inlined_call_operand.vmem [shape: f32[1,512], index: 2, kind: input, shape index: {}]
  %s3 = inlined_call_operand.hbm [shape: f32[512,384], index: 3, kind: input, shape index: {}]
  %s4 = inlined_call_operand.vmem [shape: f32[1,384], index: 4, kind: input, shape index: {}]
  %s5 = inlined_call_operand.hbm [shape: f32[384,128], index: 5, kind: input, shape index: {}]
  %s6 = inlined_call_operand.vmem [shape: f32[1,128], index: 6, kind: input, shape index: {}]
  %s7 = inlined_call_operand.vmem [shape: f32[8,128], index: 7, kind: output, shape index: {}]
  %s8 = sld [smem:[#allocation0]]
  $region54: #{actor_critic_forward.1} parent=0
    _
  %s10 = ssub.s32 1, %s8
  %s11 = scalar_select 0, %s10, %s8
  $region1: #{actor_critic_forward.1} parent=0
    #allocation2 [shape = 'u8[4096]{0}', space=vmem, size = 0x1000, scoped, tag = 'input window, operand 0, single buffered']
    #allocation3 [shape = 's32[1]{0}', space=sflag, size = 0x4, scoped, tag = 'scoped memory for actor_critic_forward.1']
    #allocation4 [shape = 'u8[32768]{0}', space=vmem, size = 0x8000, scoped, tag = 'input window, operand 1, single buffered']
    #allocation5 [shape = 's32[1]{0}', space=sflag, size = 0x4, scoped, tag = 'scoped memory for actor_critic_forward.1']
    #allocation6 [shape = 'u8[786432]{0}', space=vmem, size = 0xc0000, scoped, tag = 'input window, operand 3, single buffered']
    #allocation7 [shape = 'u8[196608]{0}', space=vmem, size = 0x30000, scoped, tag = 'input window, operand 5, single buffered']
    #allocation8 [shape = 's32[1]{0}', space=sflag, size = 0x4, scoped, tag = 'scoped memory for actor_critic_forward.1']
    %12 = vsyncpa [#allocation3], 0
    %13 = vsyncpa [#allocation5], 0
    %14 = vsyncpa [#allocation8], 0
    // Predicated region
    $region2: #{actor_critic_forward.1} parent=1 // pred_check
      _
    $region3: #{actor_critic_forward.1} parent=1 // pred_check_branch
      %16 = sbr.rel (0) target = $region5
    $region4: #{actor_critic_forward.1} parent=1 // pred_region
      %s18 = ssub.s32 128, 128
      %19 = vsyncadd [#allocation3], %s18
      %s21 = sshll.u32 [#allocation2], 4
      %s22 = int_to_ptr.vmem [resolvable:$true] %s21
      %24 = dma.hbm_to_vmem [thread:$0]  %s0, 128, %s22, [#allocation3]
    $region5: #{actor_critic_forward.1} parent=1 // pred_fallthru
      _
    // Predicated region
    $region6: #{actor_critic_forward.1} parent=1 // pred_check
      _
    $region7: #{actor_critic_forward.1} parent=1 // pred_check_branch
      %26 = sbr.rel (0) target = $region9
    $region8: #{actor_critic_forward.1} parent=1 // pred_region
      %s28 = ssub.s32 1024, 1024
      %29 = vsyncadd [#allocation5], %s28
      %s30 = sshll.u32 [#allocation4], 4
      %s31 = int_to_ptr.vmem [resolvable:$true] %s30
      %36 = dma.hbm_to_vmem [thread:$0]  %s1, 1024, %s31, [#allocation5], 512, 512, 32
    $region9: #{actor_critic_forward.1} parent=1 // pred_fallthru
      _
    // Predicated region
    $region10: #{actor_critic_forward.1} parent=1 // pred_check
      _
    $region11: #{actor_critic_forward.1} parent=1 // pred_check_branch
      %38 = sbr.rel (0) target = $region13
    $region12: #{actor_critic_forward.1} parent=1 // pred_region
      _
    $region13: #{actor_critic_forward.1} parent=1 // pred_fallthru
      _
    // Predicated region
    $region14: #{actor_critic_forward.1} parent=1 // pred_check
      _
    $region15: #{actor_critic_forward.1} parent=1 // pred_check_branch
      %40 = sbr.rel (0) target = $region17
    $region16: #{actor_critic_forward.1} parent=1 // pred_region
      %s42 = ssub.s32 24576, 24576
      %43 = vsyncadd [#allocation5], %s42
      %s44 = sshll.u32 [#allocation6], 4
      %s45 = int_to_ptr.vmem [resolvable:$true] %s44
      %50 = dma.hbm_to_vmem [thread:$0]  %s3, 24576, %s45, [#allocation5], 384, 384, 24
    $region17: #{actor_critic_forward.1} parent=1 // pred_fallthru
      _
    // Predicated region
    $region18: #{actor_critic_forward.1} parent=1 // pred_check
      _
    $region19: #{actor_critic_forward.1} parent=1 // pred_check_branch
      %52 = sbr.rel (0) target = $region21
    $region20: #{actor_critic_forward.1} parent=1 // pred_region
      _
    $region21: #{actor_critic_forward.1} parent=1 // pred_fallthru
      _
    // Predicated region
    $region22: #{actor_critic_forward.1} parent=1 // pred_check
      _
    $region23: #{actor_critic_forward.1} parent=1 // pred_check_branch
      %54 = sbr.rel (0) target = $region25
    $region24: #{actor_critic_forward.1} parent=1 // pred_region
      %s56 = ssub.s32 6144, 6144
      %57 = vsyncadd [#allocation8], %s56
      %s58 = sshll.u32 [#allocation7], 4
      %s59 = int_to_ptr.vmem [resolvable:$true] %s58
      %64 = dma.hbm_to_vmem [thread:$0]  %s5, 6144, %s59, [#allocation8], 128, 128, 8
    $region25: #{actor_critic_forward.1} parent=1 // pred_fallthru
      _
    // Predicated region
    $region26: #{actor_critic_forward.1} parent=1 // pred_check
      _
    $region27: #{actor_critic_forward.1} parent=1 // pred_check_branch
      %66 = sbr.rel (0) target = $region29
    $region28: #{actor_critic_forward.1} parent=1 // pred_region
      _
    $region29: #{actor_critic_forward.1} parent=1 // pred_fallthru
      _
    // Predicated region
    $region30: #{actor_critic_forward.1} parent=1 // pred_check
      _
    $region31: #{actor_critic_forward.1} parent=1 // pred_check_branch
      %68 = sbr.rel (0) target = $region33
    $region32: #{actor_critic_forward.1} parent=1 // pred_region
      %69 = dma.done [#allocation3], 128
    $region33: #{actor_critic_forward.1} parent=1 // pred_fallthru
      _
    // Predicated region
    $region34: #{actor_critic_forward.1} parent=1 // pred_check
      _
    $region35: #{actor_critic_forward.1} parent=1 // pred_check_branch
      %71 = sbr.rel (0) target = $region37
    $region36: #{actor_critic_forward.1} parent=1 // pred_region
      %72 = dma.done [#allocation5], 1024
    $region37: #{actor_critic_forward.1} parent=1 // pred_fallthru
      _
    // Predicated region
    $region38: #{actor_critic_forward.1} parent=1 // pred_check
      _
    $region39: #{actor_critic_forward.1} parent=1 // pred_check_branch
      %74 = sbr.rel (0) target = $region41
    $region40: #{actor_critic_forward.1} parent=1 // pred_region
      %75 = dma.done [#allocation5], 24576
    $region41: #{actor_critic_forward.1} parent=1 // pred_fallthru
      _
    // Predicated region
    $region42: #{actor_critic_forward.1} parent=1 // pred_check
      _
    $region43: #{actor_critic_forward.1} parent=1 // pred_check_branch
      %77 = sbr.rel (0) target = $region45
    $region44: #{actor_critic_forward.1} parent=1 // pred_region
      %78 = dma.done [#allocation8], 6144
    $region45: #{actor_critic_forward.1} parent=1 // pred_fallthru
      _
    %v79 = vld [vmem:[#allocation2] sm:$0xff]
    %v80 = vld [vmem:[#allocation4] sm:$0xff]
    %v81 = vld [vmem:[#allocation4 + $0x8] sm:$0xff]
    %v82 = vld [vmem:[#allocation4 + $0x10] sm:$0xff]
    %v83 = vld [vmem:[#allocation4 + $0x18] sm:$0xff]
    %v84 = vld [vmem:[#allocation4 + $0x20] sm:$0xff]
    %v85 = vld [vmem:[#allocation4 + $0x28] sm:$0xff]
    %v86 = vld [vmem:[#allocation4 + $0x30] sm:$0xff]
    %v87 = vld [vmem:[#allocation4 + $0x38] sm:$0xff]
    %v88 = vld [vmem:[%s2] sm:$0xf]
    %v90 = vlaneseq
    %v91 = vshrl.u32 %v90, 7
    %v92 = vsub.s32 0, %v91
    %v93 = vrot.slane %v88, %v92
    %v94 = vlaneseq
    %v95 = vshrl.u32 %v94, 7
    %v96 = vsub.s32 1, %v95
    %v97 = vrot.slane %v88, %v96
    %v98 = vlaneseq
    %v99 = vshrl.u32 %v98, 7
    %v100 = vsub.s32 2, %v99
    %v101 = vrot.slane %v88, %v100
    %v102 = vlaneseq
    %v103 = vshrl.u32 %v102, 7
    %v104 = vsub.s32 3, %v103
    %v105 = vrot.slane %v88, %v104
    %vm110 = vcmask 130048
    %v112 = vsel %vm110, %v79, 0
    %114 = vmatprep.subr.mxu0 %v81
    %115 = vmatpush1.msra.mxu0 %v80
    %116 = vmatprep.subr.mxu0 %v85
    %117 = vmatpush1.msra.mxu0 %v84
    %118 = vmatprep.subr.mxu0 0.0
    %119 = vmatpush1.msra.mxu0 0.0
    %120 = vmatprep.subr.mxu0 0.0
    %121 = vmatpush1.msra.mxu0 0.0
    %122 = vmatprep.subr.mxu0 0.0
    %123 = vmatpush1.msra.mxu0 0.0
    %124 = vmatprep.subr.mxu0 0.0
    %125 = vmatpush1.msra.mxu0 0.0
    %126 = vmatprep.subr.mxu0 0.0
    %127 = vmatpush1.msra.mxu0 0.0
    %128 = vmatprep.subr.mxu0 0.0
    %129 = vmatpush1.msra.mxu0 0.0
    %130 = vmatprep.subr.mxu0 0.0
    %131 = vmatpush1.msra.mxu0 0.0
    %132 = vmatprep.subr.mxu0 0.0
    %133 = vmatpush1.msra.mxu0 0.0
    %134 = vmatprep.subr.mxu0 0.0
    %135 = vmatpush1.msra.mxu0 0.0
    %136 = vmatprep.subr.mxu0 0.0
    %137 = vmatpush1.msra.mxu0 0.0
    %138 = vmatprep.subr.mxu0 0.0
    %139 = vmatpush1.msra.mxu0 0.0
    %140 = vmatprep.subr.mxu0 0.0
    %141 = vmatpush1.msra.mxu0 0.0
    %142 = vmatprep.subr.mxu0 0.0
    %143 = vmatpush1.msra.mxu0 0.0
    %144 = vmatprep.subr.mxu0 0.0
    %145 = vmatpush1.msra.mxu0 0.0
    %146 = vmatprep.subr.mxu0 0.0
    %147 = vmatpush1.msra.mxu0 0.0
    %148 = vmatprep.subr.mxu0 0.0
    %149 = vmatpush1.msra.mxu0 0.0
    %150 = vmatprep.subr.mxu0 0.0
    %151 = vmatpush1.msra.mxu0 0.0
    %152 = vmatprep.subr.mxu0 0.0
    %153 = vmatpush1.msra.mxu0 0.0
    %154 = vmatprep.subr.mxu0 0.0
    %155 = vmatpush1.msra.mxu0 0.0
    %156 = vmatprep.subr.mxu0 0.0
    %157 = vmatpush1.msra.mxu0 0.0
    %158 = vmatprep.subr.mxu0 0.0
    %159 = vmatpush1.msra.mxu0 0.0
    %160 = vmatprep.subr.mxu0 0.0
    %161 = vmatpush1.msra.mxu0 0.0
    %162 = vmatprep.subr.mxu0 0.0
    %163 = vmatpush1.msra.mxu0 0.0
    %164 = vmatprep.subr.mxu0 0.0
    %165 = vmatpush1.msra.mxu0 0.0
    %166 = vmatprep.subr.mxu0 0.0
    %167 = vmatpush1.msra.mxu0 0.0
    %168 = vmatprep.subr.mxu0 0.0
    %169 = vmatpush1.msra.mxu0 0.0
    %170 = vmatprep.subr.mxu0 0.0
    %171 = vmatpush1.msra.mxu0 0.0
    %172 = vmatprep.subr.mxu0 0.0
    %173 = vmatpush1.msra.mxu0 0.0
    %174 = vmatprep.subr.mxu0 0.0
    %175 = vmatpush1.msra.mxu0 0.0
    %176 = vmatprep.subr.mxu0 0.0
    %177 = vmatpush1.msra.mxu0 0.0
    %178 = vmatprep.mubr.f32.mxu0 0.0
    %179 = vmatmul.mubr.f32.gmra.mrb[0].mxu0 %v112
    %v180 = vpop.f32.mrb[0].mxu0
    %v181 = vadd.f32 %v93, %v180
    %v182 = vpop.f32.mrb[0].mxu0
    %v183 = vadd.f32 %v97, %v182
    %184 = vdwg.mxu0
    %185 = vmatprep.subr.mxu0 %v83
    %186 = vmatpush1.msra.mxu0 %v82
    %187 = vmatprep.subr.mxu0 %v87
    %188 = vmatpush1.msra.mxu0 %v86
    %189 = vmatprep.subr.mxu0 0.0
    %190 = vmatpush1.msra.mxu0 0.0
    %191 = vmatprep.subr.mxu0 0.0
    %192 = vmatpush1.msra.mxu0 0.0
    %193 = vmatprep.subr.mxu0 0.0
    %194 = vmatpush1.msra.mxu0 0.0
    %195 = vmatprep.subr.mxu0 0.0
    %196 = vmatpush1.msra.mxu0 0.0
    %197 = vmatprep.subr.mxu0 0.0
    %198 = vmatpush1.msra.mxu0 0.0
    %199 = vmatprep.subr.mxu0 0.0
    %200 = vmatpush1.msra.mxu0 0.0
    %201 = vmatprep.subr.mxu0 0.0
    %202 = vmatpush1.msra.mxu0 0.0
    %203 = vmatprep.subr.mxu0 0.0
    %204 = vmatpush1.msra.mxu0 0.0
    %205 = vmatprep.subr.mxu0 0.0
    %206 = vmatpush1.msra.mxu0 0.0
    %207 = vmatprep.subr.mxu0 0.0
    %208 = vmatpush1.msra.mxu0 0.0
    %209 = vmatprep.subr.mxu0 0.0
    %210 = vmatpush1.msra.mxu0 0.0
    %211 = vmatprep.subr.mxu0 0.0
    %212 = vmatpush1.msra.mxu0 0.0
    %213 = vmatprep.subr.mxu0 0.0
    %214 = vmatpush1.msra.mxu0 0.0
    %215 = vmatprep.subr.mxu0 0.0
    %216 = vmatpush1.msra.mxu0 0.0
    %217 = vmatprep.subr.mxu0 0.0
    %218 = vmatpush1.msra.mxu0 0.0
    %219 = vmatprep.subr.mxu0 0.0
    %220 = vmatpush1.msra.mxu0 0.0
    %221 = vmatprep.subr.mxu0 0.0
    %222 = vmatpush1.msra.mxu0 0.0
    %223 = vmatprep.subr.mxu0 0.0
    %224 = vmatpush1.msra.mxu0 0.0
    %225 = vmatprep.subr.mxu0 0.0
    %226 = vmatpush1.msra.mxu0 0.0
    %227 = vmatprep.subr.mxu0 0.0
    %228 = vmatpush1.msra.mxu0 0.0
    %229 = vmatprep.subr.mxu0 0.0
    %230 = vmatpush1.msra.mxu0 0.0
    %231 = vmatprep.subr.mxu0 0.0
    %232 = vmatpush1.msra.mxu0 0.0
    %233 = vmatprep.subr.mxu0 0.0
    %234 = vmatpush1.msra.mxu0 0.0
    %235 = vmatprep.subr.mxu0 0.0
    %236 = vmatpush1.msra.mxu0 0.0
    %237 = vmatprep.subr.mxu0 0.0
    %238 = vmatpush1.msra.mxu0 0.0
    %239 = vmatprep.subr.mxu0 0.0
    %240 = vmatpush1.msra.mxu0 0.0
    %241 = vmatprep.subr.mxu0 0.0
    %242 = vmatpush1.msra.mxu0 0.0
    %243 = vmatprep.subr.mxu0 0.0
    %244 = vmatpush1.msra.mxu0 0.0
    %245 = vmatprep.subr.mxu0 0.0
    %246 = vmatpush1.msra.mxu0 0.0
    %247 = vmatprep.subr.mxu0 0.0
    %248 = vmatpush1.msra.mxu0 0.0
    %249 = vmatprep.mubr.f32.mxu0 0.0
    %250 = vmatmul.mubr.f32.gmra.mrb[0].mxu0 %v112
    %v251 = vpop.f32.mrb[0].mxu0
    %v252 = vadd.f32 %v101, %v251
    %v253 = vpop.f32.mrb[0].mxu0
    %v254 = vadd.f32 %v105, %v253
    %255 = vdwg.mxu0
    %v256 = vmax.f32 %v181, 0.0
    %v257 = vmax.f32 %v183, 0.0
    %v258 = vmax.f32 %v252, 0.0
    %v259 = vmax.f32 %v254, 0.0
    %v260 = vld [vmem:[#allocation6] sm:$0xff]
    %v261 = vld [vmem:[#allocation6 + $0x8] sm:$0xff]
    %v262 = vld [vmem:[#allocation6 + $0x10] sm:$0xff]
    %v263 = vld [vmem:[#allocation6 + $0x18] sm:$0xff]
    %v264 = vld [vmem:[#allocation6 + $0x20] sm:$0xff]
    %v265 = vld [vmem:[#allocation6 + $0x28] sm:$0xff]
    %v266 = vld [vmem:[#allocation6 + $0x30] sm:$0xff]
    %v267 = vld [vmem:[#allocation6 + $0x38] sm:$0xff]
    %v268 = vld [vmem:[#allocation6 + $0x40] sm:$0xff]
    %v269 = vld [vmem:[#allocation6 + $0x48] sm:$0xff]
    %v270 = vld [vmem:[#allocation6 + $0x50] sm:$0xff]
    %v271 = vld [vmem:[#allocation6 + $0x58] sm:$0xff]
    %v272 = vld [vmem:[#allocation6 + $0x60] sm:$0xff]
    %v273 = vld [vmem:[#allocation6 + $0x68] sm:$0xff]
    %v274 = vld [vmem:[#allocation6 + $0x70] sm:$0xff]
    %v275 = vld [vmem:[#allocation6 + $0x78] sm:$0xff]
    %v276 = vld [vmem:[#allocation6 + $0x80] sm:$0xff]
    %v277 = vld [vmem:[#allocation6 + $0x88] sm:$0xff]
    %v278 = vld [vmem:[#allocation6 + $0x90] sm:$0xff]
    %v279 = vld [vmem:[#allocation6 + $0x98] sm:$0xff]
    %v280 = vld [vmem:[#allocation6 + $0xa0] sm:$0xff]
    %v281 = vld [vmem:[#allocation6 + $0xa8] sm:$0xff]
    %v282 = vld [vmem:[#allocation6 + $0xb0] sm:$0xff]
    %v283 = vld [vmem:[#allocation6 + $0xb8] sm:$0xff]
    %v284 = vld [vmem:[#allocation6 + $0xc0] sm:$0xff]
    %v285 = vld [vmem:[#allocation6 + $0xc8] sm:$0xff]
    %v286 = vld [vmem:[#allocation6 + $0xd0] sm:$0xff]
    %v287 = vld [vmem:[#allocation6 + $0xd8] sm:$0xff]
    %v288 = vld [vmem:[#allocation6 + $0xe0] sm:$0xff]
    %v289 = vld [vmem:[#allocation6 + $0xe8] sm:$0xff]
    %v290 = vld [vmem:[#allocation6 + $0xf0] sm:$0xff]
    %v291 = vld [vmem:[#allocation6 + $0xf8] sm:$0xff]
    %v292 = vld [vmem:[#allocation6 + $0x100] sm:$0xff]
    %v293 = vld [vmem:[#allocation6 + $0x108] sm:$0xff]
    %v294 = vld [vmem:[#allocation6 + $0x110] sm:$0xff]
    %v295 = vld [vmem:[#allocation6 + $0x118] sm:$0xff]
    %v296 = vld [vmem:[#allocation6 + $0x120] sm:$0xff]
    %v297 = vld [vmem:[#allocation6 + $0x128] sm:$0xff]
    %v298 = vld [vmem:[#allocation6 + $0x130] sm:$0xff]
    %v299 = vld [vmem:[#allocation6 + $0x138] sm:$0xff]
    %v300 = vld [vmem:[#allocation6 + $0x140] sm:$0xff]
    %v301 = vld [vmem:[#allocation6 + $0x148] sm:$0xff]
    %v302 = vld [vmem:[#allocation6 + $0x150] sm:$0xff]
    %v303 = vld [vmem:[#allocation6 + $0x158] sm:$0xff]
    %v304 = vld [vmem:[#allocation6 + $0x160] sm:$0xff]
    %v305 = vld [vmem:[#allocation6 + $0x168] sm:$0xff]
    %v306 = vld [vmem:[#allocation6 + $0x170] sm:$0xff]
    %v307 = vld [vmem:[#allocation6 + $0x178] sm:$0xff]
    %v308 = vld [vmem:[#allocation6 + $0x180] sm:$0xff]
    %v309 = vld [vmem:[#allocation6 + $0x188] sm:$0xff]
    %v310 = vld [vmem:[#allocation6 + $0x190] sm:$0xff]
    %v311 = vld [vmem:[#allocation6 + $0x198] sm:$0xff]
    %v312 = vld [vmem:[#allocation6 + $0x1a0] sm:$0xff]
    %v313 = vld [vmem:[#allocation6 + $0x1a8] sm:$0xff]
    %v314 = vld [vmem:[#allocation6 + $0x1b0] sm:$0xff]
    %v315 = vld [vmem:[#allocation6 + $0x1b8] sm:$0xff]
    %v316 = vld [vmem:[#allocation6 + $0x1c0] sm:$0xff]
    %v317 = vld [vmem:[#allocation6 + $0x1c8] sm:$0xff]
    %v318 = vld [vmem:[#allocation6 + $0x1d0] sm:$0xff]
    %v319 = vld [vmem:[#allocation6 + $0x1d8] sm:$0xff]
    %v320 = vld [vmem:[#allocation6 + $0x1e0] sm:$0xff]
    %v321 = vld [vmem:[#allocation6 + $0x1e8] sm:$0xff]
    %v322 = vld [vmem:[#allocation6 + $0x1f0] sm:$0xff]
    %v323 = vld [vmem:[#allocation6 + $0x1f8] sm:$0xff]
    %v324 = vld [vmem:[#allocation6 + $0x200] sm:$0xff]
    %v325 = vld [vmem:[#allocation6 + $0x208] sm:$0xff]
    %v326 = vld [vmem:[#allocation6 + $0x210] sm:$0xff]
    %v327 = vld [vmem:[#allocation6 + $0x218] sm:$0xff]
    %v328 = vld [vmem:[#allocation6 + $0x220] sm:$0xff]
    %v329 = vld [vmem:[#allocation6 + $0x228] sm:$0xff]
    %v330 = vld [vmem:[#allocation6 + $0x230] sm:$0xff]
    %v331 = vld [vmem:[#allocation6 + $0x238] sm:$0xff]
    %v332 = vld [vmem:[#allocation6 + $0x240] sm:$0xff]
    %v333 = vld [vmem:[#allocation6 + $0x248] sm:$0xff]
    %v334 = vld [vmem:[#allocation6 + $0x250] sm:$0xff]
    %v335 = vld [vmem:[#allocation6 + $0x258] sm:$0xff]
    %v336 = vld [vmem:[#allocation6 + $0x260] sm:$0xff]
    %v337 = vld [vmem:[#allocation6 + $0x268] sm:$0xff]
    %v338 = vld [vmem:[#allocation6 + $0x270] sm:$0xff]
    %v339 = vld [vmem:[#allocation6 + $0x278] sm:$0xff]
    %v340 = vld [vmem:[#allocation6 + $0x280] sm:$0xff]
    %v341 = vld [vmem:[#allocation6 + $0x288] sm:$0xff]
    %v342 = vld [vmem:[#allocation6 + $0x290] sm:$0xff]
    %v343 = vld [vmem:[#allocation6 + $0x298] sm:$0xff]
    %v344 = vld [vmem:[#allocation6 + $0x2a0] sm:$0xff]
    %v345 = vld [vmem:[#allocation6 + $0x2a8] sm:$0xff]
    %v346 = vld [vmem:[#allocation6 + $0x2b0] sm:$0xff]
    %v347 = vld [vmem:[#allocation6 + $0x2b8] sm:$0xff]
    %v348 = vld [vmem:[#allocation6 + $0x2c0] sm:$0xff]
    %v349 = vld [vmem:[#allocation6 + $0x2c8] sm:$0xff]
    %v350 = vld [vmem:[#allocation6 + $0x2d0] sm:$0xff]
    %v351 = vld [vmem:[#allocation6 + $0x2d8] sm:$0xff]
    %v352 = vld [vmem:[#allocation6 + $0x2e0] sm:$0xff]
    %v353 = vld [vmem:[#allocation6 + $0x2e8] sm:$0xff]
    %v354 = vld [vmem:[#allocation6 + $0x2f0] sm:$0xff]
    %v355 = vld [vmem:[#allocation6 + $0x2f8] sm:$0xff]
    %v356 = vld [vmem:[#allocation6 + $0x300] sm:$0xff]
    %v357 = vld [vmem:[#allocation6 + $0x308] sm:$0xff]
    %v358 = vld [vmem:[#allocation6 + $0x310] sm:$0xff]
    %v359 = vld [vmem:[#allocation6 + $0x318] sm:$0xff]
    %v360 = vld [vmem:[#allocation6 + $0x320] sm:$0xff]
    %v361 = vld [vmem:[#allocation6 + $0x328] sm:$0xff]
    %v362 = vld [vmem:[#allocation6 + $0x330] sm:$0xff]
    %v363 = vld [vmem:[#allocation6 + $0x338] sm:$0xff]
    %v364 = vld [vmem:[#allocation6 + $0x340] sm:$0xff]
    %v365 = vld [vmem:[#allocation6 + $0x348] sm:$0xff]
    %v366 = vld [vmem:[#allocation6 + $0x350] sm:$0xff]
    %v367 = vld [vmem:[#allocation6 + $0x358] sm:$0xff]
    %v368 = vld [vmem:[#allocation6 + $0x360] sm:$0xff]
    %v369 = vld [vmem:[#allocation6 + $0x368] sm:$0xff]
    %v370 = vld [vmem:[#allocation6 + $0x370] sm:$0xff]
    %v371 = vld [vmem:[#allocation6 + $0x378] sm:$0xff]
    %v372 = vld [vmem:[#allocation6 + $0x380] sm:$0xff]
    %v373 = vld [vmem:[#allocation6 + $0x388] sm:$0xff]
    %v374 = vld [vmem:[#allocation6 + $0x390] sm:$0xff]
    %v375 = vld [vmem:[#allocation6 + $0x398] sm:$0xff]
    %v376 = vld [vmem:[#allocation6 + $0x3a0] sm:$0xff]
    %v377 = vld [vmem:[#allocation6 + $0x3a8] sm:$0xff]
    %v378 = vld [vmem:[#allocation6 + $0x3b0] sm:$0xff]
    %v379 = vld [vmem:[#allocation6 + $0x3b8] sm:$0xff]
    %v380 = vld [vmem:[#allocation6 + $0x3c0] sm:$0xff]
    %v381 = vld [vmem:[#allocation6 + $0x3c8] sm:$0xff]
    %v382 = vld [vmem:[#allocation6 + $0x3d0] sm:$0xff]
    %v383 = vld [vmem:[#allocation6 + $0x3d8] sm:$0xff]
    %v384 = vld [vmem:[#allocation6 + $0x3e0] sm:$0xff]
    %v385 = vld [vmem:[#allocation6 + $0x3e8] sm:$0xff]
    %v386 = vld [vmem:[#allocation6 + $0x3f0] sm:$0xff]
    %v387 = vld [vmem:[#allocation6 + $0x3f8] sm:$0xff]
    %v388 = vld [vmem:[#allocation6 + $0x400] sm:$0xff]
    %v389 = vld [vmem:[#allocation6 + $0x408] sm:$0xff]
    %v390 = vld [vmem:[#allocation6 + $0x410] sm:$0xff]
    %v391 = vld [vmem:[#allocation6 + $0x418] sm:$0xff]
    %v392 = vld [vmem:[#allocation6 + $0x420] sm:$0xff]
    %v393 = vld [vmem:[#allocation6 + $0x428] sm:$0xff]
    %v394 = vld [vmem:[#allocation6 + $0x430] sm:$0xff]
    %v395 = vld [vmem:[#allocation6 + $0x438] sm:$0xff]
    %v396 = vld [vmem:[#allocation6 + $0x440] sm:$0xff]
    %v397 = vld [vmem:[#allocation6 + $0x448] sm:$0xff]
    %v398 = vld [vmem:[#allocation6 + $0x450] sm:$0xff]
    %v399 = vld [vmem:[#allocation6 + $0x458] sm:$0xff]
    %v400 = vld [vmem:[#allocation6 + $0x460] sm:$0xff]
    %v401 = vld [vmem:[#allocation6 + $0x468] sm:$0xff]
    %v402 = vld [vmem:[#allocation6 + $0x470] sm:$0xff]
    %v403 = vld [vmem:[#allocation6 + $0x478] sm:$0xff]
    %v404 = vld [vmem:[#allocation6 + $0x480] sm:$0xff]
    %v405 = vld [vmem:[#allocation6 + $0x488] sm:$0xff]
    %v406 = vld [vmem:[#allocation6 + $0x490] sm:$0xff]
    %v407 = vld [vmem:[#allocation6 + $0x498] sm:$0xff]
    %v408 = vld [vmem:[#allocation6 + $0x4a0] sm:$0xff]
    %v409 = vld [vmem:[#allocation6 + $0x4a8] sm:$0xff]
    %v410 = vld [vmem:[#allocation6 + $0x4b0] sm:$0xff]
    %v411 = vld [vmem:[#allocation6 + $0x4b8] sm:$0xff]
    %v412 = vld [vmem:[#allocation6 + $0x4c0] sm:$0xff]
    %v413 = vld [vmem:[#allocation6 + $0x4c8] sm:$0xff]
    %v414 = vld [vmem:[#allocation6 + $0x4d0] sm:$0xff]
    %v415 = vld [vmem:[#allocation6 + $0x4d8] sm:$0xff]
    %v416 = vld [vmem:[#allocation6 + $0x4e0] sm:$0xff]
    %v417 = vld [vmem:[#allocation6 + $0x4e8] sm:$0xff]
    %v418 = vld [vmem:[#allocation6 + $0x4f0] sm:$0xff]
    %v419 = vld [vmem:[#allocation6 + $0x4f8] sm:$0xff]
    %v420 = vld [vmem:[#allocation6 + $0x500] sm:$0xff]
    %v421 = vld [vmem:[#allocation6 + $0x508] sm:$0xff]
    %v422 = vld [vmem:[#allocation6 + $0x510] sm:$0xff]
    %v423 = vld [vmem:[#allocation6 + $0x518] sm:$0xff]
    %v424 = vld [vmem:[#allocation6 + $0x520] sm:$0xff]
    %v425 = vld [vmem:[#allocation6 + $0x528] sm:$0xff]
    %v426 = vld [vmem:[#allocation6 + $0x530] sm:$0xff]
    %v427 = vld [vmem:[#allocation6 + $0x538] sm:$0xff]
    %v428 = vld [vmem:[#allocation6 + $0x540] sm:$0xff]
    %v429 = vld [vmem:[#allocation6 + $0x548] sm:$0xff]
    %v430 = vld [vmem:[#allocation6 + $0x550] sm:$0xff]
    %v431 = vld [vmem:[#allocation6 + $0x558] sm:$0xff]
    %v432 = vld [vmem:[#allocation6 + $0x560] sm:$0xff]
    %v433 = vld [vmem:[#allocation6 + $0x568] sm:$0xff]
    %v434 = vld [vmem:[#allocation6 + $0x570] sm:$0xff]
    %v435 = vld [vmem:[#allocation6 + $0x578] sm:$0xff]
    %v436 = vld [vmem:[#allocation6 + $0x580] sm:$0xff]
    %v437 = vld [vmem:[#allocation6 + $0x588] sm:$0xff]
    %v438 = vld [vmem:[#allocation6 + $0x590] sm:$0xff]
    %v439 = vld [vmem:[#allocation6 + $0x598] sm:$0xff]
    %v440 = vld [vmem:[#allocation6 + $0x5a0] sm:$0xff]
    %v441 = vld [vmem:[#allocation6 + $0x5a8] sm:$0xff]
    %v442 = vld [vmem:[#allocation6 + $0x5b0] sm:$0xff]
    %v443 = vld [vmem:[#allocation6 + $0x5b8] sm:$0xff]
    %v444 = vld [vmem:[#allocation6 + $0x5c0] sm:$0xff]
    %v445 = vld [vmem:[#allocation6 + $0x5c8] sm:$0xff]
    %v446 = vld [vmem:[#allocation6 + $0x5d0] sm:$0xff]
    %v447 = vld [vmem:[#allocation6 + $0x5d8] sm:$0xff]
    %v448 = vld [vmem:[#allocation6 + $0x5e0] sm:$0xff]
    %v449 = vld [vmem:[#allocation6 + $0x5e8] sm:$0xff]
    %v450 = vld [vmem:[#allocation6 + $0x5f0] sm:$0xff]
    %v451 = vld [vmem:[#allocation6 + $0x5f8] sm:$0xff]
    %v452 = vld [vmem:[%s4] sm:$0x7]
    %v454 = vlaneseq
    %v455 = vshrl.u32 %v454, 7
    %v456 = vsub.s32 0, %v455
    %v457 = vrot.slane %v452, %v456
    %v458 = vlaneseq
    %v459 = vshrl.u32 %v458, 7
    %v460 = vsub.s32 1, %v459
    %v461 = vrot.slane %v452, %v460
    %v462 = vlaneseq
    %v463 = vshrl.u32 %v462, 7
    %v464 = vsub.s32 2, %v463
    %v465 = vrot.slane %v452, %v464
    %469 = vmatprep.subr.mxu0 %v261
    %470 = vmatpush1.msra.mxu0 %v260
    %471 = vmatprep.subr.mxu0 %v264
    %472 = vmatpush1.msra.mxu0 %v263
    %473 = vmatprep.subr.mxu0 %v267
    %474 = vmatpush1.msra.mxu0 %v266
    %475 = vmatprep.subr.mxu0 %v270
    %476 = vmatpush1.msra.mxu0 %v269
    %477 = vmatprep.subr.mxu0 %v273
    %478 = vmatpush1.msra.mxu0 %v272
    %479 = vmatprep.subr.mxu0 %v276
    %480 = vmatpush1.msra.mxu0 %v275
    %481 = vmatprep.subr.mxu0 %v279
    %482 = vmatpush1.msra.mxu0 %v278
    %483 = vmatprep.subr.mxu0 %v282
    %484 = vmatpush1.msra.mxu0 %v281
    %485 = vmatprep.subr.mxu0 %v285
    %486 = vmatpush1.msra.mxu0 %v284
    %487 = vmatprep.subr.mxu0 %v288
    %488 = vmatpush1.msra.mxu0 %v287
    %489 = vmatprep.subr.mxu0 %v291
    %490 = vmatpush1.msra.mxu0 %v290
    %491 = vmatprep.subr.mxu0 %v294
    %492 = vmatpush1.msra.mxu0 %v293
    %493 = vmatprep.subr.mxu0 %v297
    %494 = vmatpush1.msra.mxu0 %v296
    %495 = vmatprep.subr.mxu0 %v300
    %496 = vmatpush1.msra.mxu0 %v299
    %497 = vmatprep.subr.mxu0 %v303
    %498 = vmatpush1.msra.mxu0 %v302
    %499 = vmatprep.subr.mxu0 %v306
    %500 = vmatpush1.msra.mxu0 %v305
    %501 = vmatprep.subr.mxu0 %v309
    %502 = vmatpush1.msra.mxu0 %v308
    %503 = vmatprep.subr.mxu0 %v312
    %504 = vmatpush1.msra.mxu0 %v311
    %505 = vmatprep.subr.mxu0 %v315
    %506 = vmatpush1.msra.mxu0 %v314
    %507 = vmatprep.subr.mxu0 %v318
    %508 = vmatpush1.msra.mxu0 %v317
    %509 = vmatprep.subr.mxu0 %v321
    %510 = vmatpush1.msra.mxu0 %v320
    %511 = vmatprep.subr.mxu0 %v324
    %512 = vmatpush1.msra.mxu0 %v323
    %513 = vmatprep.subr.mxu0 %v327
    %514 = vmatpush1.msra.mxu0 %v326
    %515 = vmatprep.subr.mxu0 %v330
    %516 = vmatpush1.msra.mxu0 %v329
    %517 = vmatprep.subr.mxu0 %v333
    %518 = vmatpush1.msra.mxu0 %v332
    %519 = vmatprep.subr.mxu0 %v336
    %520 = vmatpush1.msra.mxu0 %v335
    %521 = vmatprep.subr.mxu0 %v339
    %522 = vmatpush1.msra.mxu0 %v338
    %523 = vmatprep.subr.mxu0 %v342
    %524 = vmatpush1.msra.mxu0 %v341
    %525 = vmatprep.subr.mxu0 %v345
    %526 = vmatpush1.msra.mxu0 %v344
    %527 = vmatprep.subr.mxu0 %v348
    %528 = vmatpush1.msra.mxu0 %v347
    %529 = vmatprep.subr.mxu0 %v351
    %530 = vmatpush1.msra.mxu0 %v350
    %531 = vmatprep.subr.mxu0 %v354
    %532 = vmatpush1.msra.mxu0 %v353
    %533 = vmatprep.mubr.f32.mxu0 %v257
    %534 = vmatmul.mubr.f32.gmra.mrb[0].mxu0 %v256
    %v535 = vpop.f32.mrb[0].mxu0
    %v536 = vadd.f32 %v457, %v535
    %v537 = vpop.f32.mrb[0].mxu0
    %v538 = vadd.f32 %v461, %v537
    %539 = vdwg.mxu0
    %540 = vmatprep.subr.mxu0 %v357
    %541 = vmatpush1.msra.mxu0 %v356
    %542 = vmatprep.subr.mxu0 %v360
    %543 = vmatpush1.msra.mxu0 %v359
    %544 = vmatprep.subr.mxu0 %v363
    %545 = vmatpush1.msra.mxu0 %v362
    %546 = vmatprep.subr.mxu0 %v366
    %547 = vmatpush1.msra.mxu0 %v365
    %548 = vmatprep.subr.mxu0 %v369
    %549 = vmatpush1.msra.mxu0 %v368
    %550 = vmatprep.subr.mxu0 %v372
    %551 = vmatpush1.msra.mxu0 %v371
    %552 = vmatprep.subr.mxu0 %v375
    %553 = vmatpush1.msra.mxu0 %v374
    %554 = vmatprep.subr.mxu0 %v378
    %555 = vmatpush1.msra.mxu0 %v377
    %556 = vmatprep.subr.mxu0 %v381
    %557 = vmatpush1.msra.mxu0 %v380
    %558 = vmatprep.subr.mxu0 %v384
    %559 = vmatpush1.msra.mxu0 %v383
    %560 = vmatprep.subr.mxu0 %v387
    %561 = vmatpush1.msra.mxu0 %v386
    %562 = vmatprep.subr.mxu0 %v390
    %563 = vmatpush1.msra.mxu0 %v389
    %564 = vmatprep.subr.mxu0 %v393
    %565 = vmatpush1.msra.mxu0 %v392
    %566 = vmatprep.subr.mxu0 %v396
    %567 = vmatpush1.msra.mxu0 %v395
    %568 = vmatprep.subr.mxu0 %v399
    %569 = vmatpush1.msra.mxu0 %v398
    %570 = vmatprep.subr.mxu0 %v402
    %571 = vmatpush1.msra.mxu0 %v401
    %572 = vmatprep.subr.mxu0 %v405
    %573 = vmatpush1.msra.mxu0 %v404
    %574 = vmatprep.subr.mxu0 %v408
    %575 = vmatpush1.msra.mxu0 %v407
    %576 = vmatprep.subr.mxu0 %v411
    %577 = vmatpush1.msra.mxu0 %v410
    %578 = vmatprep.subr.mxu0 %v414
    %579 = vmatpush1.msra.mxu0 %v413
    %580 = vmatprep.subr.mxu0 %v417
    %581 = vmatpush1.msra.mxu0 %v416
    %582 = vmatprep.subr.mxu0 %v420
    %583 = vmatpush1.msra.mxu0 %v419
    %584 = vmatprep.subr.mxu0 %v423
    %585 = vmatpush1.msra.mxu0 %v422
    %586 = vmatprep.subr.mxu0 %v426
    %587 = vmatpush1.msra.mxu0 %v425
    %588 = vmatprep.subr.mxu0 %v429
    %589 = vmatpush1.msra.mxu0 %v428
    %590 = vmatprep.subr.mxu0 %v432
    %591 = vmatpush1.msra.mxu0 %v431
    %592 = vmatprep.subr.mxu0 %v435
    %593 = vmatpush1.msra.mxu0 %v434
    %594 = vmatprep.subr.mxu0 %v438
    %595 = vmatpush1.msra.mxu0 %v437
    %596 = vmatprep.subr.mxu0 %v441
    %597 = vmatpush1.msra.mxu0 %v440
    %598 = vmatprep.subr.mxu0 %v444
    %599 = vmatpush1.msra.mxu0 %v443
    %600 = vmatprep.subr.mxu0 %v447
    %601 = vmatpush1.msra.mxu0 %v446
    %602 = vmatprep.subr.mxu0 %v450
    %603 = vmatpush1.msra.mxu0 %v449
    %604 = vmatprep.mubr.f32.mxu0 %v259
    %605 = vmatmul.mubr.f32.gmra.mrb[0].mxu0 %v258
    %v606 = vpop.f32.mrb[0].mxu0
    %v607 = vadd.f32 %v536, %v606
    %v608 = vpop.f32.mrb[0].mxu0
    %v609 = vadd.f32 %v538, %v608
    %610 = vdwg.mxu0
    %611 = vmatprep.subr.mxu0 0.0
    %612 = vmatpush1.msra.mxu0 %v262
    %613 = vmatprep.subr.mxu0 0.0
    %614 = vmatpush1.msra.mxu0 %v265
    %615 = vmatprep.subr.mxu0 0.0
    %616 = vmatpush1.msra.mxu0 %v268
    %617 = vmatprep.subr.mxu0 0.0
    %618 = vmatpush1.msra.mxu0 %v271
    %619 = vmatprep.subr.mxu0 0.0
    %620 = vmatpush1.msra.mxu0 %v274
    %621 = vmatprep.subr.mxu0 0.0
    %622 = vmatpush1.msra.mxu0 %v277
    %623 = vmatprep.subr.mxu0 0.0
    %624 = vmatpush1.msra.mxu0 %v280
    %625 = vmatprep.subr.mxu0 0.0
    %626 = vmatpush1.msra.mxu0 %v283
    %627 = vmatprep.subr.mxu0 0.0
    %628 = vmatpush1.msra.mxu0 %v286
    %629 = vmatprep.subr.mxu0 0.0
    %630 = vmatpush1.msra.mxu0 %v289
    %631 = vmatprep.subr.mxu0 0.0
    %632 = vmatpush1.msra.mxu0 %v292
    %633 = vmatprep.subr.mxu0 0.0
    %634 = vmatpush1.msra.mxu0 %v295
    %635 = vmatprep.subr.mxu0 0.0
    %636 = vmatpush1.msra.mxu0 %v298
    %637 = vmatprep.subr.mxu0 0.0
    %638 = vmatpush1.msra.mxu0 %v301
    %639 = vmatprep.subr.mxu0 0.0
    %640 = vmatpush1.msra.mxu0 %v304
    %641 = vmatprep.subr.mxu0 0.0
    %642 = vmatpush1.msra.mxu0 %v307
    %643 = vmatprep.subr.mxu0 0.0
    %644 = vmatpush1.msra.mxu0 %v310
    %645 = vmatprep.subr.mxu0 0.0
    %646 = vmatpush1.msra.mxu0 %v313
    %647 = vmatprep.subr.mxu0 0.0
    %648 = vmatpush1.msra.mxu0 %v316
    %649 = vmatprep.subr.mxu0 0.0
    %650 = vmatpush1.msra.mxu0 %v319
    %651 = vmatprep.subr.mxu0 0.0
    %652 = vmatpush1.msra.mxu0 %v322
    %653 = vmatprep.subr.mxu0 0.0
    %654 = vmatpush1.msra.mxu0 %v325
    %655 = vmatprep.subr.mxu0 0.0
    %656 = vmatpush1.msra.mxu0 %v328
    %657 = vmatprep.subr.mxu0 0.0
    %658 = vmatpush1.msra.mxu0 %v331
    %659 = vmatprep.subr.mxu0 0.0
    %660 = vmatpush1.msra.mxu0 %v334
    %661 = vmatprep.subr.mxu0 0.0
    %662 = vmatpush1.msra.mxu0 %v337
    %663 = vmatprep.subr.mxu0 0.0
    %664 = vmatpush1.msra.mxu0 %v340
    %665 = vmatprep.subr.mxu0 0.0
    %666 = vmatpush1.msra.mxu0 %v343
    %667 = vmatprep.subr.mxu0 0.0
    %668 = vmatpush1.msra.mxu0 %v346
    %669 = vmatprep.subr.mxu0 0.0
    %670 = vmatpush1.msra.mxu0 %v349
    %671 = vmatprep.subr.mxu0 0.0
    %672 = vmatpush1.msra.mxu0 %v352
    %673 = vmatprep.subr.mxu0 0.0
    %674 = vmatpush1.msra.mxu0 %v355
    %675 = vmatprep.mubr.f32.mxu0 %v257
    %676 = vmatmul.mubr.f32.gmra.mrb[0].mxu0 %v256
    %v677 = vpop.f32.mrb[0].mxu0
    %v678 = vadd.f32 %v465, %v677
    %v679 = vpop.f32.mrb[0].mxu0
    %680 = vdwg.mxu0
    %681 = vmatprep.subr.mxu0 0.0
    %682 = vmatpush1.msra.mxu0 %v358
    %683 = vmatprep.subr.mxu0 0.0
    %684 = vmatpush1.msra.mxu0 %v361
    %685 = vmatprep.subr.mxu0 0.0
    %686 = vmatpush1.msra.mxu0 %v364
    %687 = vmatprep.subr.mxu0 0.0
    %688 = vmatpush1.msra.mxu0 %v367
    %689 = vmatprep.subr.mxu0 0.0
    %690 = vmatpush1.msra.mxu0 %v370
    %691 = vmatprep.subr.mxu0 0.0
    %692 = vmatpush1.msra.mxu0 %v373
    %693 = vmatprep.subr.mxu0 0.0
    %694 = vmatpush1.msra.mxu0 %v376
    %695 = vmatprep.subr.mxu0 0.0
    %696 = vmatpush1.msra.mxu0 %v379
    %697 = vmatprep.subr.mxu0 0.0
    %698 = vmatpush1.msra.mxu0 %v382
    %699 = vmatprep.subr.mxu0 0.0
    %700 = vmatpush1.msra.mxu0 %v385
    %701 = vmatprep.subr.mxu0 0.0
    %702 = vmatpush1.msra.mxu0 %v388
    %703 = vmatprep.subr.mxu0 0.0
    %704 = vmatpush1.msra.mxu0 %v391
    %705 = vmatprep.subr.mxu0 0.0
    %706 = vmatpush1.msra.mxu0 %v394
    %707 = vmatprep.subr.mxu0 0.0
    %708 = vmatpush1.msra.mxu0 %v397
    %709 = vmatprep.subr.mxu0 0.0
    %710 = vmatpush1.msra.mxu0 %v400
    %711 = vmatprep.subr.mxu0 0.0
    %712 = vmatpush1.msra.mxu0 %v403
    %713 = vmatprep.subr.mxu0 0.0
    %714 = vmatpush1.msra.mxu0 %v406
    %715 = vmatprep.subr.mxu0 0.0
    %716 = vmatpush1.msra.mxu0 %v409
    %717 = vmatprep.subr.mxu0 0.0
    %718 = vmatpush1.msra.mxu0 %v412
    %719 = vmatprep.subr.mxu0 0.0
    %720 = vmatpush1.msra.mxu0 %v415
    %721 = vmatprep.subr.mxu0 0.0
    %722 = vmatpush1.msra.mxu0 %v418
    %723 = vmatprep.subr.mxu0 0.0
    %724 = vmatpush1.msra.mxu0 %v421
    %725 = vmatprep.subr.mxu0 0.0
    %726 = vmatpush1.msra.mxu0 %v424
    %727 = vmatprep.subr.mxu0 0.0
    %728 = vmatpush1.msra.mxu0 %v427
    %729 = vmatprep.subr.mxu0 0.0
    %730 = vmatpush1.msra.mxu0 %v430
    %731 = vmatprep.subr.mxu0 0.0
    %732 = vmatpush1.msra.mxu0 %v433
    %733 = vmatprep.subr.mxu0 0.0
    %734 = vmatpush1.msra.mxu0 %v436
    %735 = vmatprep.subr.mxu0 0.0
    %736 = vmatpush1.msra.mxu0 %v439
    %737 = vmatprep.subr.mxu0 0.0
    %738 = vmatpush1.msra.mxu0 %v442
    %739 = vmatprep.subr.mxu0 0.0
    %740 = vmatpush1.msra.mxu0 %v445
    %741 = vmatprep.subr.mxu0 0.0
    %742 = vmatpush1.msra.mxu0 %v448
    %743 = vmatprep.subr.mxu0 0.0
    %744 = vmatpush1.msra.mxu0 %v451
    %745 = vmatprep.mubr.f32.mxu0 %v259
    %746 = vmatmul.mubr.f32.gmra.mrb[0].mxu0 %v258
    %v747 = vpop.f32.mrb[0].mxu0
    %v748 = vadd.f32 %v678, %v747
    %v749 = vpop.f32.mrb[0].mxu0
    %750 = vdwg.mxu0
    %v751 = vmax.f32 %v607, 0.0
    %v752 = vmax.f32 %v609, 0.0
    %v753 = vmax.f32 %v748, 0.0
    %v754 = vld [vmem:[#allocation7] sm:$0xff]
    %v755 = vld [vmem:[#allocation7 + $0x8] sm:$0xff]
    %v756 = vld [vmem:[#allocation7 + $0x10] sm:$0xff]
    %v757 = vld [vmem:[#allocation7 + $0x18] sm:$0xff]
    %v758 = vld [vmem:[#allocation7 + $0x20] sm:$0xff]
    %v759 = vld [vmem:[#allocation7 + $0x28] sm:$0xff]
    %v760 = vld [vmem:[#allocation7 + $0x30] sm:$0xff]
    %v761 = vld [vmem:[#allocation7 + $0x38] sm:$0xff]
    %v762 = vld [vmem:[#allocation7 + $0x40] sm:$0xff]
    %v763 = vld [vmem:[#allocation7 + $0x48] sm:$0xff]
    %v764 = vld [vmem:[#allocation7 + $0x50] sm:$0xff]
    %v765 = vld [vmem:[#allocation7 + $0x58] sm:$0xff]
    %v766 = vld [vmem:[#allocation7 + $0x60] sm:$0xff]
    %v767 = vld [vmem:[#allocation7 + $0x68] sm:$0xff]
    %v768 = vld [vmem:[#allocation7 + $0x70] sm:$0xff]
    %v769 = vld [vmem:[#allocation7 + $0x78] sm:$0xff]
    %v770 = vld [vmem:[#allocation7 + $0x80] sm:$0xff]
    %v771 = vld [vmem:[#allocation7 + $0x88] sm:$0xff]
    %v772 = vld [vmem:[#allocation7 + $0x90] sm:$0xff]
    %v773 = vld [vmem:[#allocation7 + $0x98] sm:$0xff]
    %v774 = vld [vmem:[#allocation7 + $0xa0] sm:$0xff]
    %v775 = vld [vmem:[#allocation7 + $0xa8] sm:$0xff]
    %v776 = vld [vmem:[#allocation7 + $0xb0] sm:$0xff]
    %v777 = vld [vmem:[#allocation7 + $0xb8] sm:$0xff]
    %v778 = vld [vmem:[#allocation7 + $0xc0] sm:$0xff]
    %v779 = vld [vmem:[#allocation7 + $0xc8] sm:$0xff]
    %v780 = vld [vmem:[#allocation7 + $0xd0] sm:$0xff]
    %v781 = vld [vmem:[#allocation7 + $0xd8] sm:$0xff]
    %v782 = vld [vmem:[#allocation7 + $0xe0] sm:$0xff]
    %v783 = vld [vmem:[#allocation7 + $0xe8] sm:$0xff]
    %v784 = vld [vmem:[#allocation7 + $0xf0] sm:$0xff]
    %v785 = vld [vmem:[#allocation7 + $0xf8] sm:$0xff]
    %v786 = vld [vmem:[#allocation7 + $0x100] sm:$0xff]
    %v787 = vld [vmem:[#allocation7 + $0x108] sm:$0xff]
    %v788 = vld [vmem:[#allocation7 + $0x110] sm:$0xff]
    %v789 = vld [vmem:[#allocation7 + $0x118] sm:$0xff]
    %v790 = vld [vmem:[#allocation7 + $0x120] sm:$0xff]
    %v791 = vld [vmem:[#allocation7 + $0x128] sm:$0xff]
    %v792 = vld [vmem:[#allocation7 + $0x130] sm:$0xff]
    %v793 = vld [vmem:[#allocation7 + $0x138] sm:$0xff]
    %v794 = vld [vmem:[#allocation7 + $0x140] sm:$0xff]
    %v795 = vld [vmem:[#allocation7 + $0x148] sm:$0xff]
    %v796 = vld [vmem:[#allocation7 + $0x150] sm:$0xff]
    %v797 = vld [vmem:[#allocation7 + $0x158] sm:$0xff]
    %v798 = vld [vmem:[#allocation7 + $0x160] sm:$0xff]
    %v799 = vld [vmem:[#allocation7 + $0x168] sm:$0xff]
    %v800 = vld [vmem:[#allocation7 + $0x170] sm:$0xff]
    %v801 = vld [vmem:[#allocation7 + $0x178] sm:$0xff]
    %v802 = vld [vmem:[%s6] sm:$0x1]
    %v804 = vlaneseq
    %v805 = vshrl.u32 %v804, 7
    %v806 = vsub.s32 0, %v805
    %v807 = vrot.slane %v802, %v806
    %809 = vmatprep.subr.mxu0 0.0
    %810 = vmatpush1.msra.mxu0 %v754
    %811 = vmatprep.subr.mxu0 0.0
    %812 = vmatpush1.msra.mxu0 %v755
    %813 = vmatprep.subr.mxu0 0.0
    %814 = vmatpush1.msra.mxu0 %v756
    %815 = vmatprep.subr.mxu0 0.0
    %816 = vmatpush1.msra.mxu0 %v757
    %817 = vmatprep.subr.mxu0 0.0
    %818 = vmatpush1.msra.mxu0 %v758
    %819 = vmatprep.subr.mxu0 0.0
    %820 = vmatpush1.msra.mxu0 %v759
    %821 = vmatprep.subr.mxu0 0.0
    %822 = vmatpush1.msra.mxu0 %v760
    %823 = vmatprep.subr.mxu0 0.0
    %824 = vmatpush1.msra.mxu0 %v761
    %825 = vmatprep.subr.mxu0 0.0
    %826 = vmatpush1.msra.mxu0 %v762
    %827 = vmatprep.subr.mxu0 0.0
    %828 = vmatpush1.msra.mxu0 %v763
    %829 = vmatprep.subr.mxu0 0.0
    %830 = vmatpush1.msra.mxu0 %v764
    %831 = vmatprep.subr.mxu0 0.0
    %832 = vmatpush1.msra.mxu0 %v765
    %833 = vmatprep.subr.mxu0 0.0
    %834 = vmatpush1.msra.mxu0 %v766
    %835 = vmatprep.subr.mxu0 0.0
    %836 = vmatpush1.msra.mxu0 %v767
    %837 = vmatprep.subr.mxu0 0.0
    %838 = vmatpush1.msra.mxu0 %v768
    %839 = vmatprep.subr.mxu0 0.0
    %840 = vmatpush1.msra.mxu0 %v769
    %841 = vmatprep.subr.mxu0 0.0
    %842 = vmatpush1.msra.mxu0 %v770
    %843 = vmatprep.subr.mxu0 0.0
    %844 = vmatpush1.msra.mxu0 %v771
    %845 = vmatprep.subr.mxu0 0.0
    %846 = vmatpush1.msra.mxu0 %v772
    %847 = vmatprep.subr.mxu0 0.0
    %848 = vmatpush1.msra.mxu0 %v773
    %849 = vmatprep.subr.mxu0 0.0
    %850 = vmatpush1.msra.mxu0 %v774
    %851 = vmatprep.subr.mxu0 0.0
    %852 = vmatpush1.msra.mxu0 %v775
    %853 = vmatprep.subr.mxu0 0.0
    %854 = vmatpush1.msra.mxu0 %v776
    %855 = vmatprep.subr.mxu0 0.0
    %856 = vmatpush1.msra.mxu0 %v777
    %857 = vmatprep.subr.mxu0 0.0
    %858 = vmatpush1.msra.mxu0 %v778
    %859 = vmatprep.subr.mxu0 0.0
    %860 = vmatpush1.msra.mxu0 %v779
    %861 = vmatprep.subr.mxu0 0.0
    %862 = vmatpush1.msra.mxu0 %v780
    %863 = vmatprep.subr.mxu0 0.0
    %864 = vmatpush1.msra.mxu0 %v781
    %865 = vmatprep.subr.mxu0 0.0
    %866 = vmatpush1.msra.mxu0 %v782
    %867 = vmatprep.subr.mxu0 0.0
    %868 = vmatpush1.msra.mxu0 %v783
    %869 = vmatprep.subr.mxu0 0.0
    %870 = vmatpush1.msra.mxu0 %v784
    %871 = vmatprep.subr.mxu0 0.0
    %872 = vmatpush1.msra.mxu0 %v785
    %873 = vmatprep.mubr.f32.mxu0 %v752
    %874 = vmatmul.mubr.f32.gmra.mrb[0].mxu0 %v751
    %v875 = vpop.f32.mrb[0].mxu0
    %v876 = vadd.f32 %v807, %v875
    %v877 = vpop.f32.mrb[0].mxu0
    %878 = vdwg.mxu0
    %879 = vmatprep.subr.mxu0 0.0
    %880 = vmatpush1.msra.mxu0 %v786
    %881 = vmatprep.subr.mxu0 0.0
    %882 = vmatpush1.msra.mxu0 %v787
    %883 = vmatprep.subr.mxu0 0.0
    %884 = vmatpush1.msra.mxu0 %v788
    %885 = vmatprep.subr.mxu0 0.0
    %886 = vmatpush1.msra.mxu0 %v789
    %887 = vmatprep.subr.mxu0 0.0
    %888 = vmatpush1.msra.mxu0 %v790
    %889 = vmatprep.subr.mxu0 0.0
    %890 = vmatpush1.msra.mxu0 %v791
    %891 = vmatprep.subr.mxu0 0.0
    %892 = vmatpush1.msra.mxu0 %v792
    %893 = vmatprep.subr.mxu0 0.0
    %894 = vmatpush1.msra.mxu0 %v793
    %895 = vmatprep.subr.mxu0 0.0
    %896 = vmatpush1.msra.mxu0 %v794
    %897 = vmatprep.subr.mxu0 0.0
    %898 = vmatpush1.msra.mxu0 %v795
    %899 = vmatprep.subr.mxu0 0.0
    %900 = vmatpush1.msra.mxu0 %v796
    %901 = vmatprep.subr.mxu0 0.0
    %902 = vmatpush1.msra.mxu0 %v797
    %903 = vmatprep.subr.mxu0 0.0
    %904 = vmatpush1.msra.mxu0 %v798
    %905 = vmatprep.subr.mxu0 0.0
    %906 = vmatpush1.msra.mxu0 %v799
    %907 = vmatprep.subr.mxu0 0.0
    %908 = vmatpush1.msra.mxu0 %v800
    %909 = vmatprep.subr.mxu0 0.0
    %910 = vmatpush1.msra.mxu0 %v801
    %911 = vmatprep.subr.mxu0 0.0
    %912 = vmatpush1.msra.mxu0 0.0
    %913 = vmatprep.subr.mxu0 0.0
    %914 = vmatpush1.msra.mxu0 0.0
    %915 = vmatprep.subr.mxu0 0.0
    %916 = vmatpush1.msra.mxu0 0.0
    %917 = vmatprep.subr.mxu0 0.0
    %918 = vmatpush1.msra.mxu0 0.0
    %919 = vmatprep.subr.mxu0 0.0
    %920 = vmatpush1.msra.mxu0 0.0
    %921 = vmatprep.subr.mxu0 0.0
    %922 = vmatpush1.msra.mxu0 0.0
    %923 = vmatprep.subr.mxu0 0.0
    %924 = vmatpush1.msra.mxu0 0.0
    %925 = vmatprep.subr.mxu0 0.0
    %926 = vmatpush1.msra.mxu0 0.0
    %927 = vmatprep.subr.mxu0 0.0
    %928 = vmatpush1.msra.mxu0 0.0
    %929 = vmatprep.subr.mxu0 0.0
    %930 = vmatpush1.msra.mxu0 0.0
    %931 = vmatprep.subr.mxu0 0.0
    %932 = vmatpush1.msra.mxu0 0.0
    %933 = vmatprep.subr.mxu0 0.0
    %934 = vmatpush1.msra.mxu0 0.0
    %935 = vmatprep.subr.mxu0 0.0
    %936 = vmatpush1.msra.mxu0 0.0
    %937 = vmatprep.subr.mxu0 0.0
    %938 = vmatpush1.msra.mxu0 0.0
    %939 = vmatprep.subr.mxu0 0.0
    %940 = vmatpush1.msra.mxu0 0.0
    %941 = vmatprep.subr.mxu0 0.0
    %942 = vmatpush1.msra.mxu0 0.0
    %943 = vmatprep.mubr.f32.mxu0 0.0
    %944 = vmatmul.mubr.f32.gmra.mrb[0].mxu0 %v753
    %v945 = vpop.f32.mrb[0].mxu0
    %v946 = vadd.f32 %v876, %v945
    %v947 = vpop.f32.mrb[0].mxu0
    %948 = vdwg.mxu0
    %v949 = vlaneseq
    %v950 = vand.u32 %v949, 127
    %vm951 = vcmp.lt.s32.totalorder %v950, 4
    %v952 = vtanh.pop %v946
    %v953 = vsel %vm951, %v952, %v946
    %954 = vst [vmem:[%s7] sm:$0xff] %v953
    // Predicated region
    $region46: #{actor_critic_forward.1} parent=1 // pred_check
      _
    $region47: #{actor_critic_forward.1} parent=1 // pred_check_branch
      %956 = sbr.rel (0) target = $region49
    $region48: #{actor_critic_forward.1} parent=1 // pred_region
      _
    $region49: #{actor_critic_forward.1} parent=1 // pred_fallthru
      _
    // Predicated region
    $region50: #{actor_critic_forward.1} parent=1 // pred_check
      _
    $region51: #{actor_critic_forward.1} parent=1 // pred_check_branch
      %958 = sbr.rel (0) target = $region53
    $region52: #{actor_critic_forward.1} parent=1 // pred_region
      _
    $region53: #{actor_critic_forward.1} parent=1 // pred_fallthru
      _
    %959 = vsyncpa [#allocation3], 1
    %960 = vsyncpa [#allocation5], 1
    %961 = vsyncpa [#allocation8], 1

</llo_original>
